<compile_context>
chip_gen: v7x
topology: tpu7x:2x2x1
jax: 0.10.0
libtpu: 0.0.40
codegen_flags: <defaults>
</compile_context>

<pallas_src>
import jax
import jax.numpy as jnp
from jax import lax
from jax.experimental import pallas as pl
from jax.experimental.pallas import tpu as pltpu

LN_EPS = 1e-5  # torch.nn.LayerNorm default


def _round_up(a: int, b: int) -> int:
    return (a + b - 1) // b * b


def _ffn_kernel(x_ref, w1_ref, b1_ref, w2_ref, b2_ref, g_ref, beta_ref, o_ref):
    # x_ref: (TM, size) tile of flattened inputs, in its native dtype.
    x = x_ref[...]

    # Linear1 + ReLU: MXU operands stay in the input/weight dtype, accumulate f32.
    h = jnp.dot(x, w1_ref[...], preferred_element_type=jnp.float32)
    h = h + b1_ref[...].astype(jnp.float32)
    h = jnp.maximum(h, 0.0)
    # TODO(synk): dropout_rate == 0.0 (eval forward); for a nonzero rate build
    # dropout masks with pltpu.prng_seed + pltpu.stateful_bernoulli here.

    # Linear2: cast the f32 hidden activation back to the weight dtype for the
    # MXU (no-op for f32 weights), accumulate in f32.
    y = jnp.dot(h.astype(w2_ref.dtype), w2_ref[...],
                preferred_element_type=jnp.float32)
    y = y + b2_ref[...].astype(jnp.float32)

    # Residual + LayerNorm over the last (size) axis — always in f32.
    y = y + x.astype(jnp.float32)
    mean = jnp.mean(y, axis=-1, keepdims=True)
    var = jnp.mean((y - mean) * (y - mean), axis=-1, keepdims=True)
    y = (y - mean) * lax.rsqrt(var + LN_EPS)
    out = y * g_ref[...].astype(jnp.float32) + beta_ref[...].astype(jnp.float32)

    o_ref[...] = out.astype(o_ref.dtype)


def normalized_positionwise_ffn(x, w1, b1, w2, b2, gamma, beta, *, tile_rows=256):
    """x: (B, L, size). w1: (size, hidden), w2: (hidden, size) (pre-transposed)."""
    B, L, size = x.shape
    hidden = w1.shape[1]
    M = B * L

    # Row-tile selection: large TM for MXU occupancy, shrunk for tiny inputs,
    # always a multiple of 8 (sublane granularity).
    tm = min(_round_up(tile_rows, 8), _round_up(M, 8))
    Mp = _round_up(M, tm)

    x2 = x.reshape(M, size)
    if Mp != M:
        x2 = jnp.pad(x2, ((0, Mp - M), (0, 0)))  # pad rows; dropped after the call

    b1_2 = b1.reshape(1, hidden)
    b2_2 = b2.reshape(1, size)
    g_2 = gamma.reshape(1, size)
    be_2 = beta.reshape(1, size)

    grid = (Mp // tm,)

    itemsize_x = jnp.dtype(x.dtype).itemsize
    itemsize_w = jnp.dtype(w1.dtype).itemsize
    cost = pl.CostEstimate(
        flops=int(4 * Mp * size * hidden + 10 * Mp * size),
        transcendentals=int(Mp),  # one rsqrt per row
        bytes_accessed=int(2 * Mp * size * itemsize_x
                           + 2 * size * hidden * itemsize_w
                           + (hidden + 3 * size) * 4),
    )

    out = pl.pallas_call(
        _ffn_kernel,
        out_shape=jax.ShapeDtypeStruct((Mp, size), x.dtype),
        grid_spec=pltpu.PrefetchScalarGridSpec(
            num_scalar_prefetch=0,
            grid=grid,
            in_specs=[
                pl.BlockSpec((tm, size), lambda i: (i, 0)),      # x tile
                pl.BlockSpec((size, hidden), lambda i: (0, 0)),  # W1 (resident)
                pl.BlockSpec((1, hidden), lambda i: (0, 0)),     # b1 (resident)
                pl.BlockSpec((hidden, size), lambda i: (0, 0)),  # W2 (resident)
                pl.BlockSpec((1, size), lambda i: (0, 0)),       # b2 (resident)
                pl.BlockSpec((1, size), lambda i: (0, 0)),       # LN gamma
                pl.BlockSpec((1, size), lambda i: (0, 0)),       # LN beta
            ],
            out_specs=pl.BlockSpec((tm, size), lambda i: (i, 0)),
        ),
        compiler_params=pltpu.CompilerParams(
            dimension_semantics=("parallel",),      # shards M across TCs on v7x
            vmem_limit_bytes=64 * 1024 * 1024,      # above default scoped limit
        ),
        cost_estimate=cost,
    )(x2, w1, b1_2, w2, b2_2, g_2, be_2)

    return out[:M].reshape(B, L, size)


def _reference(x, w1, b1, w2, b2, gamma, beta):
    h = jnp.maximum(x @ w1 + b1, 0.0)
    y = h @ w2 + b2 + x
    mean = jnp.mean(y, axis=-1, keepdims=True)
    var = jnp.mean((y - mean) ** 2, axis=-1, keepdims=True)
    return (y - mean) / jnp.sqrt(var + LN_EPS) * gamma + beta


if __name__ == "__main__":
    # size % 128 == 0 -> lane-dense output stores; still small shapes.
    B, L, size, hidden = 2, 8, 128, 256

    key = jax.random.PRNGKey(0)
    kx, kw1, kw2 = jax.random.split(key, 3)

    x = jax.random.normal(kx, (B, L, size), dtype=jnp.float32)

    # reset_parameters(): weights ~ N(0, 0.02), biases = 0.
    # torch stores Linear weight as (out, in); pre-transposed here to (in, out).
    w1 = (0.02 * jax.random.normal(kw1, (hidden, size), dtype=jnp.float32)).T
    b1 = jnp.zeros((hidden,), dtype=jnp.float32)
    w2 = (0.02 * jax.random.normal(kw2, (size, hidden), dtype=jnp.float32)).T
    b2 = jnp.zeros((size,), dtype=jnp.float32)

    # LayerNorm(size) default affine params.
    gamma = jnp.ones((size,), dtype=jnp.float32)
    beta = jnp.zeros((size,), dtype=jnp.float32)

    out = normalized_positionwise_ffn(x, w1, b1, w2, b2, gamma, beta)
    out = jax.block_until_ready(out)

    ref = _reference(x, w1, b1, w2, b2, gamma, beta)
    assert out.shape == (B, L, size)
    # Tolerance covers TPU default (bf16-pass) matmul precision in the XLA ref.
    assert jnp.allclose(out, ref, atol=1e-2, rtol=1e-2), "mismatch vs f32 reference"

    # bf16 fast path: dots run on the bf16 MXU with f32 accumulation;
    # residual + LayerNorm remain f32 inside the kernel.
    out_bf16 = normalized_positionwise_ffn(
        x.astype(jnp.bfloat16),
        w1.astype(jnp.bfloat16), b1,
        w2.astype(jnp.bfloat16), b2,
        gamma, beta,
    )
    out_bf16 = jax.block_until_ready(out_bf16)
    assert out_bf16.shape == (B, L, size)
    assert float(jnp.max(jnp.abs(out_bf16.astype(jnp.float32) - ref))) < 0.1, \
        "bf16 path mismatch vs f32 reference"

    print("KERNEL_OK")
</pallas_src>

<mosaic_0001>
module attributes {stable_mosaic.version = 11 : i64} {
  func.func @_ffn_kernel(%arg0: i32, %arg1: memref<16x128xf32, #tpu.memory_space<vmem>>, %arg2: memref<128x256xf32, #tpu.memory_space<vmem>>, %arg3: memref<1x256xf32, #tpu.memory_space<vmem>>, %arg4: memref<256x128xf32, #tpu.memory_space<vmem>>, %arg5: memref<1x128xf32, #tpu.memory_space<vmem>>, %arg6: memref<1x128xf32, #tpu.memory_space<vmem>>, %arg7: memref<1x128xf32, #tpu.memory_space<vmem>>, %arg8: memref<16x128xf32, #tpu.memory_space<vmem>>) attributes {dimension_semantics = [#tpu.dimension_semantics<parallel>], iteration_bounds = array<i64: 1>, scalar_prefetch = 0 : i64, scratch_operands = 0 : i64, tpu.core_type = #tpu.core_type<tc>, window_params = [{transform_indices = @transform_0, window_bounds = array<i64: 16, 128>}, {pipeline_mode = #tpu.pipeline_mode<synchronous>, transform_indices = @transform_1, window_bounds = array<i64: 128, 256>}, {pipeline_mode = #tpu.pipeline_mode<synchronous>, transform_indices = @transform_2, window_bounds = array<i64: 1, 256>}, {pipeline_mode = #tpu.pipeline_mode<synchronous>, transform_indices = @transform_3, window_bounds = array<i64: 256, 128>}, {pipeline_mode = #tpu.pipeline_mode<synchronous>, transform_indices = @transform_4, window_bounds = array<i64: 1, 128>}, {pipeline_mode = #tpu.pipeline_mode<synchronous>, transform_indices = @transform_5, window_bounds = array<i64: 1, 128>}, {pipeline_mode = #tpu.pipeline_mode<synchronous>, transform_indices = @transform_6, window_bounds = array<i64: 1, 128>}, {transform_indices = @transform_7, window_bounds = array<i64: 16, 128>}]} {
    %c0 = arith.constant 0 : index
    %c0_0 = arith.constant 0 : index
    %0 = vector.load %arg1[%c0, %c0_0] : memref<16x128xf32, #tpu.memory_space<vmem>>, vector<16x128xf32>
    %c0_1 = arith.constant 0 : index
    %c0_2 = arith.constant 0 : index
    %1 = vector.load %arg2[%c0_1, %c0_2] : memref<128x256xf32, #tpu.memory_space<vmem>>, vector<128x256xf32>
    %cst = arith.constant dense<0.000000e+00> : vector<16x256xf32>
    %2 = tpu.matmul %0, %1, %cst {dimension_numbers = #tpu.dot_dimension_numbers<[1], [0], [0], [1], [0, 0, 1, 1], [], []>} : vector<16x128xf32>, vector<128x256xf32>, vector<16x256xf32> -> vector<16x256xf32>
    %c0_3 = arith.constant 0 : index
    %c0_4 = arith.constant 0 : index
    %3 = vector.load %arg3[%c0_3, %c0_4] : memref<1x256xf32, #tpu.memory_space<vmem>>, vector<1x256xf32>
    %4 = vector.broadcast %3 : vector<1x256xf32> to vector<16x256xf32>
    %5 = arith.addf %2, %4 : vector<16x256xf32>
    %cst_5 = arith.constant 0.000000e+00 : f32
    %6 = vector.broadcast %cst_5 : f32 to vector<16x256xf32>
    %7 = arith.maximumf %5, %6 : vector<16x256xf32>
    %c0_6 = arith.constant 0 : index
    %c0_7 = arith.constant 0 : index
    %8 = vector.load %arg4[%c0_6, %c0_7] : memref<256x128xf32, #tpu.memory_space<vmem>>, vector<256x128xf32>
    %cst_8 = arith.constant dense<0.000000e+00> : vector<16x128xf32>
    %9 = tpu.matmul %7, %8, %cst_8 {dimension_numbers = #tpu.dot_dimension_numbers<[1], [0], [0], [1], [0, 0, 1, 1], [], []>} : vector<16x256xf32>, vector<256x128xf32>, vector<16x128xf32> -> vector<16x128xf32>
    %c0_9 = arith.constant 0 : index
    %c0_10 = arith.constant 0 : index
    %10 = vector.load %arg5[%c0_9, %c0_10] : memref<1x128xf32, #tpu.memory_space<vmem>>, vector<1x128xf32>
    %11 = vector.broadcast %10 : vector<1x128xf32> to vector<16x128xf32>
    %12 = arith.addf %9, %11 : vector<16x128xf32>
    %13 = arith.addf %12, %0 : vector<16x128xf32>
    %cst_11 = arith.constant dense<0.000000e+00> : vector<16xf32>
    %14 = vector.multi_reduction <add>, %13, %cst_11 [1] : vector<16x128xf32> to vector<16xf32>
    %15 = vector.shape_cast %14 : vector<16xf32> to vector<16x1xf32>
    %cst_12 = arith.constant 1.280000e+02 : f32
    %16 = vector.broadcast %cst_12 : f32 to vector<16x1xf32>
    %17 = arith.divf %15, %16 : vector<16x1xf32>
    %18 = vector.broadcast %17 : vector<16x1xf32> to vector<16x128xf32>
    %19 = arith.subf %13, %18 : vector<16x128xf32>
    %20 = vector.broadcast %17 : vector<16x1xf32> to vector<16x128xf32>
    %21 = arith.subf %13, %20 : vector<16x128xf32>
    %22 = arith.mulf %19, %21 : vector<16x128xf32>
    %cst_13 = arith.constant dense<0.000000e+00> : vector<16xf32>
    %23 = vector.multi_reduction <add>, %22, %cst_13 [1] : vector<16x128xf32> to vector<16xf32>
    %24 = vector.shape_cast %23 : vector<16xf32> to vector<16x1xf32>
    %cst_14 = arith.constant 1.280000e+02 : f32
    %25 = vector.broadcast %cst_14 : f32 to vector<16x1xf32>
    %26 = arith.divf %24, %25 : vector<16x1xf32>
    %27 = vector.broadcast %17 : vector<16x1xf32> to vector<16x128xf32>
    %28 = arith.subf %13, %27 : vector<16x128xf32>
    %cst_15 = arith.constant 9.99999974E-6 : f32
    %29 = vector.broadcast %cst_15 : f32 to vector<16x1xf32>
    %30 = arith.addf %26, %29 : vector<16x1xf32>
    %31 = math.rsqrt %30 : vector<16x1xf32>
    %32 = vector.broadcast %31 : vector<16x1xf32> to vector<16x128xf32>
    %33 = arith.mulf %28, %32 : vector<16x128xf32>
    %c0_16 = arith.constant 0 : index
    %c0_17 = arith.constant 0 : index
    %34 = vector.load %arg6[%c0_16, %c0_17] : memref<1x128xf32, #tpu.memory_space<vmem>>, vector<1x128xf32>
    %35 = vector.broadcast %34 : vector<1x128xf32> to vector<16x128xf32>
    %36 = arith.mulf %33, %35 : vector<16x128xf32>
    %c0_18 = arith.constant 0 : index
    %c0_19 = arith.constant 0 : index
    %37 = vector.load %arg7[%c0_18, %c0_19] : memref<1x128xf32, #tpu.memory_space<vmem>>, vector<1x128xf32>
    %38 = vector.broadcast %37 : vector<1x128xf32> to vector<16x128xf32>
    %39 = arith.addf %36, %38 : vector<16x128xf32>
    %c0_20 = arith.constant 0 : index
    %c0_21 = arith.constant 0 : index
    %40 = vector.load %arg8[%c0_20, %c0_21] : memref<16x128xf32, #tpu.memory_space<vmem>>, vector<16x128xf32>
    tpu.vector_store %arg8[%c0_20, %c0_21], %39 {strides = array<i32>} : memref<16x128xf32, #tpu.memory_space<vmem>>, vector<16x128xf32>,
    return
  }
  func.func @transform_0(%arg0: i32) -> (i32, i32) {
    %c0_i32 = arith.constant 0 : i32
    %c0_i32_0 = arith.constant 0 : i32
    return %arg0, %c0_i32 : i32, i32
  }
  func.func @transform_1(%arg0: i32) -> (i32, i32) {
    %c0_i32 = arith.constant 0 : i32
    %c0_i32_0 = arith.constant 0 : i32
    %c0_i32_1 = arith.constant 0 : i32
    return %c0_i32, %c0_i32_0 : i32, i32
  }
  func.func @transform_2(%arg0: i32) -> (i32, i32) {
    %c0_i32 = arith.constant 0 : i32
    %c0_i32_0 = arith.constant 0 : i32
    %c0_i32_1 = arith.constant 0 : i32
    return %c0_i32, %c0_i32_0 : i32, i32
  }
  func.func @transform_3(%arg0: i32) -> (i32, i32) {
    %c0_i32 = arith.constant 0 : i32
    %c0_i32_0 = arith.constant 0 : i32
    %c0_i32_1 = arith.constant 0 : i32
    return %c0_i32, %c0_i32_0 : i32, i32
  }
  func.func @transform_4(%arg0: i32) -> (i32, i32) {
    %c0_i32 = arith.constant 0 : i32
    %c0_i32_0 = arith.constant 0 : i32
    %c0_i32_1 = arith.constant 0 : i32
    return %c0_i32, %c0_i32_0 : i32, i32
  }
  func.func @transform_5(%arg0: i32) -> (i32, i32) {
    %c0_i32 = arith.constant 0 : i32
    %c0_i32_0 = arith.constant 0 : i32
    %c0_i32_1 = arith.constant 0 : i32
    return %c0_i32, %c0_i32_0 : i32, i32
  }
  func.func @transform_6(%arg0: i32) -> (i32, i32) {
    %c0_i32 = arith.constant 0 : i32
    %c0_i32_0 = arith.constant 0 : i32
    %c0_i32_1 = arith.constant 0 : i32
    return %c0_i32, %c0_i32_0 : i32, i32
  }
  func.func @transform_7(%arg0: i32) -> (i32, i32) {
    %c0_i32 = arith.constant 0 : i32
    %c0_i32_0 = arith.constant 0 : i32
    return %arg0, %c0_i32 : i32, i32
  }
}

</mosaic_0001>

<llo_original>
// kernel: tpu_custom_call.1
$region0: #{tpu_custom_call.1}
  #allocation0 [shape = 'u32[]', space=smem, size = 0x4, offset = 0x4, fixed_abs, tag = 'smem constant byte address 0x4 - core index']
  #allocation1 [shape = 'u32[144,128]{1,0:T(1,128)}', space=vmem, size = 0x12000, scoped, tag = 'internal scratch']
  %s0 = inlined_call_operand.hbm [shape: f32[16,128], index: 0, kind: input, shape index: {}]
  %s1 = inlined_call_operand.hbm [shape: f32[128,256], index: 1, kind: input, shape index: {}]
  %s2 = inlined_call_operand.hbm [shape: f32[1,256], index: 2, kind: input, shape index: {}]
  %s3 = inlined_call_operand.hbm [shape: f32[256,128], index: 3, kind: input, shape index: {}]
  %s4 = inlined_call_operand.hbm [shape: f32[1,128], index: 4, kind: input, shape index: {}]
  %s5 = inlined_call_operand.hbm [shape: f32[1,128], index: 5, kind: input, shape index: {}]
  %s6 = inlined_call_operand.hbm [shape: f32[1,128], index: 6, kind: input, shape index: {}]
  %s7 = inlined_call_operand.hbm [shape: f32[16,128], index: 7, kind: output, shape index: {}]
  %s8 = sld [smem:[#allocation0]]
  $region66: #{tpu_custom_call.1} parent=0
    _
  %s10 = ssub.s32 1, %s8
  %s11 = scalar_select 0, %s10, %s8
  $region1: #{tpu_custom_call.1} parent=0
    #allocation2 [shape = 'u8[8192]{0}', space=vmem, size = 0x2000, scoped, tag = 'input window, operand 0, single buffered']
    #allocation3 [shape = 's32[1]{0}', space=sflag, size = 0x4, scoped, tag = 'scoped memory for tpu_custom_call.1']
    #allocation4 [shape = 's32[1]{0}', space=sflag, size = 0x4, scoped, tag = 'scoped memory for tpu_custom_call.1']
    #allocation5 [shape = 'u8[131072]{0}', space=vmem, size = 0x20000, scoped, tag = 'input window, operand 1, single buffered']
    #allocation6 [shape = 's32[1]{0}', space=sflag, size = 0x4, scoped, tag = 'scoped memory for tpu_custom_call.1']
    #allocation7 [shape = 'u8[1024]{0}', space=vmem, size = 0x400, scoped, tag = 'input window, operand 2, single buffered']
    #allocation8 [shape = 'u8[131072]{0}', space=vmem, size = 0x20000, scoped, tag = 'input window, operand 3, single buffered']
    #allocation9 [shape = 's32[1]{0}', space=sflag, size = 0x4, scoped, tag = 'scoped memory for tpu_custom_call.1']
    #allocation10 [shape = 'u8[512]{0}', space=vmem, size = 0x400, scoped, tag = 'input window, operand 4, single buffered']
    #allocation11 [shape = 'u8[512]{0}', space=vmem, size = 0x400, scoped, tag = 'input window, operand 5, single buffered']
    #allocation12 [shape = 's32[1]{0}', space=sflag, size = 0x4, scoped, tag = 'scoped memory for tpu_custom_call.1']
    #allocation13 [shape = 'u8[512]{0}', space=vmem, size = 0x400, scoped, tag = 'input window, operand 6, single buffered']
    #allocation14 [shape = 'u8[8192]{0}', space=vmem, size = 0x2000, scoped, tag = 'output window, operand 0, single buffered']
    %12 = vsyncpa [#allocation3], 0
    %13 = vsyncpa [#allocation6], 0
    %14 = vsyncpa [#allocation9], 0
    %15 = vsyncpa [#allocation12], 0
    %16 = vsyncpa [#allocation4], 0
    // Predicated region
    $region2: #{tpu_custom_call.1} parent=1 // pred_check
      _
    $region3: #{tpu_custom_call.1} parent=1 // pred_check_branch
      %18 = sbr.rel (0) target = $region5
    $region4: #{tpu_custom_call.1} parent=1 // pred_region
      %s20 = ssub.s32 256, 256
      %21 = vsyncadd [#allocation3], %s20
      %s22 = sshll.u32 [#allocation2], 4
      %s23 = int_to_ptr.vmem [resolvable:$true] %s22
      %28 = dma.hbm_to_vmem [thread:$0]  %s0, 256, %s23, [#allocation3], 128, 128, 8
    $region5: #{tpu_custom_call.1} parent=1 // pred_fallthru
      _
    // Predicated region
    $region6: #{tpu_custom_call.1} parent=1 // pred_check
      _
    $region7: #{tpu_custom_call.1} parent=1 // pred_check_branch
      %30 = sbr.rel (0) target = $region9
    $region8: #{tpu_custom_call.1} parent=1 // pred_region
      %s32 = ssub.s32 4096, 4096
      %33 = vsyncadd [#allocation6], %s32
      %s34 = sshll.u32 [#allocation5], 4
      %s35 = int_to_ptr.vmem [resolvable:$true] %s34
      %40 = dma.hbm_to_vmem [thread:$0]  %s1, 4096, %s35, [#allocation6], 256, 256, 16
    $region9: #{tpu_custom_call.1} parent=1 // pred_fallthru
      _
    // Predicated region
    $region10: #{tpu_custom_call.1} parent=1 // pred_check
      _
    $region11: #{tpu_custom_call.1} parent=1 // pred_check_branch
      %42 = sbr.rel (0) target = $region13
    $region12: #{tpu_custom_call.1} parent=1 // pred_region
      %s44 = ssub.s32 32, 32
      %45 = vsyncadd [#allocation6], %s44
      %s47 = sshll.u32 [#allocation7], 4
      %s48 = int_to_ptr.vmem [resolvable:$true] %s47
      %50 = dma.hbm_to_vmem [thread:$0]  %s2, 32, %s48, [#allocation6]
    $region13: #{tpu_custom_call.1} parent=1 // pred_fallthru
      _
    // Predicated region
    $region14: #{tpu_custom_call.1} parent=1 // pred_check
      _
    $region15: #{tpu_custom_call.1} parent=1 // pred_check_branch
      %52 = sbr.rel (0) target = $region17
    $region16: #{tpu_custom_call.1} parent=1 // pred_region
      %s54 = ssub.s32 4096, 4096
      %55 = vsyncadd [#allocation9], %s54
      %s56 = sshll.u32 [#allocation8], 4
      %s57 = int_to_ptr.vmem [resolvable:$true] %s56
      %62 = dma.hbm_to_vmem [thread:$0]  %s3, 4096, %s57, [#allocation9], 128, 128, 8
    $region17: #{tpu_custom_call.1} parent=1 // pred_fallthru
      _
    // Predicated region
    $region18: #{tpu_custom_call.1} parent=1 // pred_check
      _
    $region19: #{tpu_custom_call.1} parent=1 // pred_check_branch
      %64 = sbr.rel (0) target = $region21
    $region20: #{tpu_custom_call.1} parent=1 // pred_region
      %s66 = ssub.s32 16, 16
      %67 = vsyncadd [#allocation9], %s66
      %s69 = sshll.u32 [#allocation10], 4
      %s70 = int_to_ptr.vmem [resolvable:$true] %s69
      %72 = dma.hbm_to_vmem [thread:$0]  %s4, 16, %s70, [#allocation9]
    $region21: #{tpu_custom_call.1} parent=1 // pred_fallthru
      _
    // Predicated region
    $region22: #{tpu_custom_call.1} parent=1 // pred_check
      _
    $region23: #{tpu_custom_call.1} parent=1 // pred_check_branch
      %74 = sbr.rel (0) target = $region25
    $region24: #{tpu_custom_call.1} parent=1 // pred_region
      %s76 = ssub.s32 16, 16
      %77 = vsyncadd [#allocation12], %s76
      %s79 = sshll.u32 [#allocation11], 4
      %s80 = int_to_ptr.vmem [resolvable:$true] %s79
      %82 = dma.hbm_to_vmem [thread:$0]  %s5, 16, %s80, [#allocation12]
    $region25: #{tpu_custom_call.1} parent=1 // pred_fallthru
      _
    // Predicated region
    $region26: #{tpu_custom_call.1} parent=1 // pred_check
      _
    $region27: #{tpu_custom_call.1} parent=1 // pred_check_branch
      %84 = sbr.rel (0) target = $region29
    $region28: #{tpu_custom_call.1} parent=1 // pred_region
      %s86 = ssub.s32 16, 16
      %87 = vsyncadd [#allocation12], %s86
      %s89 = sshll.u32 [#allocation13], 4
      %s90 = int_to_ptr.vmem [resolvable:$true] %s89
      %92 = dma.hbm_to_vmem [thread:$0]  %s6, 16, %s90, [#allocation12]
    $region29: #{tpu_custom_call.1} parent=1 // pred_fallthru
      _
    // Predicated region
    $region30: #{tpu_custom_call.1} parent=1 // pred_check
      _
    $region31: #{tpu_custom_call.1} parent=1 // pred_check_branch
      %94 = sbr.rel (0) target = $region33
    $region32: #{tpu_custom_call.1} parent=1 // pred_region
      %95 = dma.done [#allocation3], 256
    $region33: #{tpu_custom_call.1} parent=1 // pred_fallthru
      _
    // Predicated region
    $region34: #{tpu_custom_call.1} parent=1 // pred_check
      _
    $region35: #{tpu_custom_call.1} parent=1 // pred_check_branch
      %97 = sbr.rel (0) target = $region37
    $region36: #{tpu_custom_call.1} parent=1 // pred_region
      %98 = dma.done [#allocation6], 4096
    $region37: #{tpu_custom_call.1} parent=1 // pred_fallthru
      _
    // Predicated region
    $region38: #{tpu_custom_call.1} parent=1 // pred_check
      _
    $region39: #{tpu_custom_call.1} parent=1 // pred_check_branch
      %100 = sbr.rel (0) target = $region41
    $region40: #{tpu_custom_call.1} parent=1 // pred_region
      %101 = dma.done [#allocation6], 32
    $region41: #{tpu_custom_call.1} parent=1 // pred_fallthru
      _
    // Predicated region
    $region42: #{tpu_custom_call.1} parent=1 // pred_check
      _
    $region43: #{tpu_custom_call.1} parent=1 // pred_check_branch
      %103 = sbr.rel (0) target = $region45
    $region44: #{tpu_custom_call.1} parent=1 // pred_region
      %104 = dma.done [#allocation9], 4096
    $region45: #{tpu_custom_call.1} parent=1 // pred_fallthru
      _
    // Predicated region
    $region46: #{tpu_custom_call.1} parent=1 // pred_check
      _
    $region47: #{tpu_custom_call.1} parent=1 // pred_check_branch
      %106 = sbr.rel (0) target = $region49
    $region48: #{tpu_custom_call.1} parent=1 // pred_region
      %107 = dma.done [#allocation9], 16
    $region49: #{tpu_custom_call.1} parent=1 // pred_fallthru
      _
    // Predicated region
    $region50: #{tpu_custom_call.1} parent=1 // pred_check
      _
    $region51: #{tpu_custom_call.1} parent=1 // pred_check_branch
      %109 = sbr.rel (0) target = $region53
    $region52: #{tpu_custom_call.1} parent=1 // pred_region
      %110 = dma.done [#allocation12], 16
    $region53: #{tpu_custom_call.1} parent=1 // pred_fallthru
      _
    // Predicated region
    $region54: #{tpu_custom_call.1} parent=1 // pred_check
      _
    $region55: #{tpu_custom_call.1} parent=1 // pred_check_branch
      %112 = sbr.rel (0) target = $region57
    $region56: #{tpu_custom_call.1} parent=1 // pred_region
      %113 = dma.done [#allocation12], 16
    $region57: #{tpu_custom_call.1} parent=1 // pred_fallthru
      _
    %v114 = vld [vmem:[#allocation2] sm:$0xff]
    %v115 = vld [vmem:[#allocation2 + $0x8] sm:$0xff]
    %v116 = vld [vmem:[#allocation5] sm:$0xff]
    %v117 = vld [vmem:[#allocation5 + $0x8] sm:$0xff]
    %v118 = vld [vmem:[#allocation5 + $0x10] sm:$0xff]
    %v119 = vld [vmem:[#allocation5 + $0x18] sm:$0xff]
    %v120 = vld [vmem:[#allocation5 + $0x20] sm:$0xff]
    %v121 = vld [vmem:[#allocation5 + $0x28] sm:$0xff]
    %v122 = vld [vmem:[#allocation5 + $0x30] sm:$0xff]
    %v123 = vld [vmem:[#allocation5 + $0x38] sm:$0xff]
    %v124 = vld [vmem:[#allocation5 + $0x40] sm:$0xff]
    %v125 = vld [vmem:[#allocation5 + $0x48] sm:$0xff]
    %v126 = vld [vmem:[#allocation5 + $0x50] sm:$0xff]
    %v127 = vld [vmem:[#allocation5 + $0x58] sm:$0xff]
    %v128 = vld [vmem:[#allocation5 + $0x60] sm:$0xff]
    %v129 = vld [vmem:[#allocation5 + $0x68] sm:$0xff]
    %v130 = vld [vmem:[#allocation5 + $0x70] sm:$0xff]
    %v131 = vld [vmem:[#allocation5 + $0x78] sm:$0xff]
    %v132 = vld [vmem:[#allocation5 + $0x80] sm:$0xff]
    %v133 = vld [vmem:[#allocation5 + $0x88] sm:$0xff]
    %v134 = vld [vmem:[#allocation5 + $0x90] sm:$0xff]
    %v135 = vld [vmem:[#allocation5 + $0x98] sm:$0xff]
    %v136 = vld [vmem:[#allocation5 + $0xa0] sm:$0xff]
    %v137 = vld [vmem:[#allocation5 + $0xa8] sm:$0xff]
    %v138 = vld [vmem:[#allocation5 + $0xb0] sm:$0xff]
    %v139 = vld [vmem:[#allocation5 + $0xb8] sm:$0xff]
    %v140 = vld [vmem:[#allocation5 + $0xc0] sm:$0xff]
    %v141 = vld [vmem:[#allocation5 + $0xc8] sm:$0xff]
    %v142 = vld [vmem:[#allocation5 + $0xd0] sm:$0xff]
    %v143 = vld [vmem:[#allocation5 + $0xd8] sm:$0xff]
    %v144 = vld [vmem:[#allocation5 + $0xe0] sm:$0xff]
    %v145 = vld [vmem:[#allocation5 + $0xe8] sm:$0xff]
    %v146 = vld [vmem:[#allocation5 + $0xf0] sm:$0xff]
    %v147 = vld [vmem:[#allocation5 + $0xf8] sm:$0xff]
    %v148 = vld [vmem:[#allocation7] sm:$0x3]
    %v150 = vlaneseq
    %v151 = vshrl.u32 %v150, 7
    %v152 = vsub.s32 0, %v151
    %v153 = vrot.slane %v148, %v152
    %v154 = vlaneseq
    %v155 = vshrl.u32 %v154, 7
    %v156 = vsub.s32 1, %v155
    %v157 = vrot.slane %v148, %v156
    %160 = vmatprep.subr.mxu0 %v117
    %161 = vmatpush1.msra.mxu0 %v116
    %162 = vmatprep.subr.mxu0 %v119
    %163 = vmatpush1.msra.mxu0 %v118
    %164 = vmatprep.subr.mxu0 %v121
    %165 = vmatpush1.msra.mxu0 %v120
    %166 = vmatprep.subr.mxu0 %v123
    %167 = vmatpush1.msra.mxu0 %v122
    %168 = vmatprep.subr.mxu0 %v125
    %169 = vmatpush1.msra.mxu0 %v124
    %170 = vmatprep.subr.mxu0 %v127
    %171 = vmatpush1.msra.mxu0 %v126
    %172 = vmatprep.subr.mxu0 %v129
    %173 = vmatpush1.msra.mxu0 %v128
    %174 = vmatprep.subr.mxu0 %v131
    %175 = vmatpush1.msra.mxu0 %v130
    %176 = vmatprep.subr.mxu0 %v133
    %177 = vmatpush1.msra.mxu0 %v132
    %178 = vmatprep.subr.mxu0 %v135
    %179 = vmatpush1.msra.mxu0 %v134
    %180 = vmatprep.subr.mxu0 %v137
    %181 = vmatpush1.msra.mxu0 %v136
    %182 = vmatprep.subr.mxu0 %v139
    %183 = vmatpush1.msra.mxu0 %v138
    %184 = vmatprep.subr.mxu0 %v141
    %185 = vmatpush1.msra.mxu0 %v140
    %186 = vmatprep.subr.mxu0 %v143
    %187 = vmatpush1.msra.mxu0 %v142
    %188 = vmatprep.subr.mxu0 %v145
    %189 = vmatpush1.msra.mxu0 %v144
    %190 = vmatprep.subr.mxu0 %v147
    %191 = vmatpush1.msra.mxu0 %v146
    %192 = vmatprep.subr.mxu0 0.0
    %193 = vmatpush1.msra.mxu0 0.0
    %194 = vmatprep.subr.mxu0 0.0
    %195 = vmatpush1.msra.mxu0 0.0
    %196 = vmatprep.subr.mxu0 0.0
    %197 = vmatpush1.msra.mxu0 0.0
    %198 = vmatprep.subr.mxu0 0.0
    %199 = vmatpush1.msra.mxu0 0.0
    %200 = vmatprep.subr.mxu0 0.0
    %201 = vmatpush1.msra.mxu0 0.0
    %202 = vmatprep.subr.mxu0 0.0
    %203 = vmatpush1.msra.mxu0 0.0
    %204 = vmatprep.subr.mxu0 0.0
    %205 = vmatpush1.msra.mxu0 0.0
    %206 = vmatprep.subr.mxu0 0.0
    %207 = vmatpush1.msra.mxu0 0.0
    %208 = vmatprep.subr.mxu0 0.0
    %209 = vmatpush1.msra.mxu0 0.0
    %210 = vmatprep.subr.mxu0 0.0
    %211 = vmatpush1.msra.mxu0 0.0
    %212 = vmatprep.subr.mxu0 0.0
    %213 = vmatpush1.msra.mxu0 0.0
    %214 = vmatprep.subr.mxu0 0.0
    %215 = vmatpush1.msra.mxu0 0.0
    %216 = vmatprep.subr.mxu0 0.0
    %217 = vmatpush1.msra.mxu0 0.0
    %218 = vmatprep.subr.mxu0 0.0
    %219 = vmatpush1.msra.mxu0 0.0
    %220 = vmatprep.subr.mxu0 0.0
    %221 = vmatpush1.msra.mxu0 0.0
    %222 = vmatprep.subr.mxu0 0.0
    %223 = vmatpush1.msra.mxu0 0.0
    %224 = vmatprep.mubr.f32.mxu0 0.0
    %225 = vmatmul.mubr.f32.gmra.mrb[0].mxu0 %v114
    %v226 = vpop.f32.mrb[0].mxu0
    %v227 = vadd.f32 %v153, %v226
    %v228 = vpop.f32.mrb[0].mxu0
    %v229 = vadd.f32 %v157, %v228
    %230 = vmatprep.mubr.f32.mxu0 0.0
    %231 = vmatmul.mubr.f32.gmra.mrb[0].mxu0 %v115
    %v232 = vpop.f32.mrb[0].mxu0
    %v233 = vadd.f32 %v153, %v232
    %v234 = vpop.f32.mrb[0].mxu0
    %v235 = vadd.f32 %v157, %v234
    %236 = vdwg.mxu0
    %v237 = vmax.f32 %v227, 0.0
    %v238 = vmax.f32 %v229, 0.0
    %v239 = vmax.f32 %v233, 0.0
    %v240 = vmax.f32 %v235, 0.0
    %v241 = vld [vmem:[#allocation8] sm:$0xff]
    %v242 = vld [vmem:[#allocation8 + $0x8] sm:$0xff]
    %v243 = vld [vmem:[#allocation8 + $0x10] sm:$0xff]
    %v244 = vld [vmem:[#allocation8 + $0x18] sm:$0xff]
    %v245 = vld [vmem:[#allocation8 + $0x20] sm:$0xff]
    %v246 = vld [vmem:[#allocation8 + $0x28] sm:$0xff]
    %v247 = vld [vmem:[#allocation8 + $0x30] sm:$0xff]
    %v248 = vld [vmem:[#allocation8 + $0x38] sm:$0xff]
    %v249 = vld [vmem:[#allocation8 + $0x40] sm:$0xff]
    %v250 = vld [vmem:[#allocation8 + $0x48] sm:$0xff]
    %v251 = vld [vmem:[#allocation8 + $0x50] sm:$0xff]
    %v252 = vld [vmem:[#allocation8 + $0x58] sm:$0xff]
    %v253 = vld [vmem:[#allocation8 + $0x60] sm:$0xff]
    %v254 = vld [vmem:[#allocation8 + $0x68] sm:$0xff]
    %v255 = vld [vmem:[#allocation8 + $0x70] sm:$0xff]
    %v256 = vld [vmem:[#allocation8 + $0x78] sm:$0xff]
    %v257 = vld [vmem:[#allocation8 + $0x80] sm:$0xff]
    %v258 = vld [vmem:[#allocation8 + $0x88] sm:$0xff]
    %v259 = vld [vmem:[#allocation8 + $0x90] sm:$0xff]
    %v260 = vld [vmem:[#allocation8 + $0x98] sm:$0xff]
    %v261 = vld [vmem:[#allocation8 + $0xa0] sm:$0xff]
    %v262 = vld [vmem:[#allocation8 + $0xa8] sm:$0xff]
    %v263 = vld [vmem:[#allocation8 + $0xb0] sm:$0xff]
    %v264 = vld [vmem:[#allocation8 + $0xb8] sm:$0xff]
    %v265 = vld [vmem:[#allocation8 + $0xc0] sm:$0xff]
    %v266 = vld [vmem:[#allocation8 + $0xc8] sm:$0xff]
    %v267 = vld [vmem:[#allocation8 + $0xd0] sm:$0xff]
    %v268 = vld [vmem:[#allocation8 + $0xd8] sm:$0xff]
    %v269 = vld [vmem:[#allocation8 + $0xe0] sm:$0xff]
    %v270 = vld [vmem:[#allocation8 + $0xe8] sm:$0xff]
    %v271 = vld [vmem:[#allocation8 + $0xf0] sm:$0xff]
    %v272 = vld [vmem:[#allocation8 + $0xf8] sm:$0xff]
    %v273 = vld [vmem:[#allocation10] sm:$0x1]
    %v275 = vlaneseq
    %v276 = vshrl.u32 %v275, 7
    %v277 = vsub.s32 0, %v276
    %v278 = vrot.slane %v273, %v277
    %280 = vmatprep.subr.mxu0 0.0
    %281 = vmatpush1.msra.mxu0 %v241
    %282 = vmatprep.subr.mxu0 0.0
    %283 = vmatpush1.msra.mxu0 %v242
    %284 = vmatprep.subr.mxu0 0.0
    %285 = vmatpush1.msra.mxu0 %v243
    %286 = vmatprep.subr.mxu0 0.0
    %287 = vmatpush1.msra.mxu0 %v244
    %288 = vmatprep.subr.mxu0 0.0
    %289 = vmatpush1.msra.mxu0 %v245
    %290 = vmatprep.subr.mxu0 0.0
    %291 = vmatpush1.msra.mxu0 %v246
    %292 = vmatprep.subr.mxu0 0.0
    %293 = vmatpush1.msra.mxu0 %v247
    %294 = vmatprep.subr.mxu0 0.0
    %295 = vmatpush1.msra.mxu0 %v248
    %296 = vmatprep.subr.mxu0 0.0
    %297 = vmatpush1.msra.mxu0 %v249
    %298 = vmatprep.subr.mxu0 0.0
    %299 = vmatpush1.msra.mxu0 %v250
    %300 = vmatprep.subr.mxu0 0.0
    %301 = vmatpush1.msra.mxu0 %v251
    %302 = vmatprep.subr.mxu0 0.0
    %303 = vmatpush1.msra.mxu0 %v252
    %304 = vmatprep.subr.mxu0 0.0
    %305 = vmatpush1.msra.mxu0 %v253
    %306 = vmatprep.subr.mxu0 0.0
    %307 = vmatpush1.msra.mxu0 %v254
    %308 = vmatprep.subr.mxu0 0.0
    %309 = vmatpush1.msra.mxu0 %v255
    %310 = vmatprep.subr.mxu0 0.0
    %311 = vmatpush1.msra.mxu0 %v256
    %312 = vmatprep.subr.mxu0 0.0
    %313 = vmatpush1.msra.mxu0 %v257
    %314 = vmatprep.subr.mxu0 0.0
    %315 = vmatpush1.msra.mxu0 %v258
    %316 = vmatprep.subr.mxu0 0.0
    %317 = vmatpush1.msra.mxu0 %v259
    %318 = vmatprep.subr.mxu0 0.0
    %319 = vmatpush1.msra.mxu0 %v260
    %320 = vmatprep.subr.mxu0 0.0
    %321 = vmatpush1.msra.mxu0 %v261
    %322 = vmatprep.subr.mxu0 0.0
    %323 = vmatpush1.msra.mxu0 %v262
    %324 = vmatprep.subr.mxu0 0.0
    %325 = vmatpush1.msra.mxu0 %v263
    %326 = vmatprep.subr.mxu0 0.0
    %327 = vmatpush1.msra.mxu0 %v264
    %328 = vmatprep.subr.mxu0 0.0
    %329 = vmatpush1.msra.mxu0 %v265
    %330 = vmatprep.subr.mxu0 0.0
    %331 = vmatpush1.msra.mxu0 %v266
    %332 = vmatprep.subr.mxu0 0.0
    %333 = vmatpush1.msra.mxu0 %v267
    %334 = vmatprep.subr.mxu0 0.0
    %335 = vmatpush1.msra.mxu0 %v268
    %336 = vmatprep.subr.mxu0 0.0
    %337 = vmatpush1.msra.mxu0 %v269
    %338 = vmatprep.subr.mxu0 0.0
    %339 = vmatpush1.msra.mxu0 %v270
    %340 = vmatprep.subr.mxu0 0.0
    %341 = vmatpush1.msra.mxu0 %v271
    %342 = vmatprep.subr.mxu0 0.0
    %343 = vmatpush1.msra.mxu0 %v272
    %344 = vmatprep.mubr.f32.mxu0 %v238
    %345 = vmatmul.mubr.f32.gmra.mrb[0].mxu0 %v237
    %v346 = vpop.f32.mrb[0].mxu0
    %v347 = vadd.f32 %v278, %v346
    %v348 = vpop.f32.mrb[0].mxu0
    %349 = vmatprep.mubr.f32.mxu0 %v240
    %350 = vmatmul.mubr.f32.gmra.mrb[0].mxu0 %v239
    %v351 = vpop.f32.mrb[0].mxu0
    %v352 = vadd.f32 %v278, %v351
    %v353 = vpop.f32.mrb[0].mxu0
    %354 = vdwg.mxu0
    %v355 = vadd.f32 %v347, %v114
    %v356 = vadd.f32 %v352, %v115
    %357 = vadd.xlane.f32.xlu0 %v355
    %v358 = vpop.xlane.xlu0 %357
    %359 = vadd.xlane.f32.xlu0 %v356
    %v360 = vpop.xlane.xlu0 %359
    %v361 = vrcp.pop 128.0
    %v362 = vmul.f32 %v358, %v361
    %v363 = vmul.f32 %v360, %v361
    %v364 = vsub.f32 %v355, %v362
    %v365 = vsub.f32 %v356, %v363
    %v366 = vmul.f32 %v364, %v364
    %v367 = vmul.f32 %v365, %v365
    %368 = vadd.xlane.f32.xlu0 %v366
    %v369 = vpop.xlane.xlu0 %368
    %370 = vadd.xlane.f32.xlu0 %v367
    %v371 = vpop.xlane.xlu0 %370
    %v372 = vmul.f32 %v369, %v361
    %v373 = vmul.f32 %v371, %v361
    %v374 = vadd.f32 %v372, 1e-05
    %v375 = vadd.f32 %v373, 1e-05
    %v376 = vrsqrt.pop %v374
    %v377 = vrsqrt.pop %v375
    %v378 = vmul.f32 %v364, %v376
    %v379 = vmul.f32 %v365, %v377
    %v380 = vld [vmem:[#allocation11] sm:$0x1]
    %v382 = vlaneseq
    %v383 = vshrl.u32 %v382, 7
    %v384 = vsub.s32 0, %v383
    %v385 = vrot.slane %v380, %v384
    %v387 = vmul.f32 %v378, %v385
    %v388 = vmul.f32 %v379, %v385
    %v389 = vld [vmem:[#allocation13] sm:$0x1]
    %v391 = vlaneseq
    %v392 = vshrl.u32 %v391, 7
    %v393 = vsub.s32 0, %v392
    %v394 = vrot.slane %v389, %v393
    %v396 = vadd.f32 %v387, %v394
    %v397 = vadd.f32 %v388, %v394
    %398 = vst [vmem:[#allocation14] sm:$0xff] %v396
    %399 = vst [vmem:[#allocation14 + $0x8] sm:$0xff] %v397
    // Predicated region
    $region58: #{tpu_custom_call.1} parent=1 // pred_check
      _
    $region59: #{tpu_custom_call.1} parent=1 // pred_check_branch
      %401 = sbr.rel (0) target = $region61
    $region60: #{tpu_custom_call.1} parent=1 // pred_region
      %s403 = ssub.s32 256, 256
      %404 = vsyncadd [#allocation4], %s403
      %s405 = sshll.u32 [#allocation14], 4
      %s406 = int_to_ptr.vmem [resolvable:$true] %s405
      %411 = dma.vmem_to_hbm [thread:$0]  %s406, 256, %s7, [#allocation4], 128, 128, 8
    $region61: #{tpu_custom_call.1} parent=1 // pred_fallthru
      _
    // Predicated region
    $region62: #{tpu_custom_call.1} parent=1 // pred_check
      _
    $region63: #{tpu_custom_call.1} parent=1 // pred_check_branch
      %413 = sbr.rel (0) target = $region65
    $region64: #{tpu_custom_call.1} parent=1 // pred_region
      %414 = dma.done [#allocation4], 256
    $region65: #{tpu_custom_call.1} parent=1 // pred_fallthru
      _
    %415 = vsyncpa [#allocation3], 1
    %416 = vsyncpa [#allocation6], 1
    %417 = vsyncpa [#allocation9], 1
    %418 = vsyncpa [#allocation12], 1
    %419 = vsyncpa [#allocation4], 1

</llo_original>
